<compile_context>
chip_gen: v7x
topology: tpu7x:2x2x1
jax: 0.10.0
libtpu: 0.0.40
codegen_flags: <defaults>
</compile_context>

<pallas_src>
import functools

import jax
import jax.numpy as jnp
from jax.experimental import pallas as pl
from jax.experimental.pallas import tpu as pltpu


_LANE = 128
_SMALL_FAST_PATH_BYTES = 256 * 1024  # below this, plain jnp.where beats a custom call


def _const_impute_kernel(x_ref, o_ref, *, val):
    x = x_ref[...]
    # Scalar third operand -> single VPU select with a splat, no full_like broadcast.
    o_ref[...] = jnp.where(jnp.isnan(x), jnp.asarray(val, x.dtype), x)


def _sublane_unit(dtype) -> int:
    """Native sublane tile rows for this dtype: 8 (f32), 16 (bf16/f16), 32 (int8/fp8)."""
    itemsize = jnp.dtype(dtype).itemsize
    return max(8, 32 // max(itemsize, 1))


def _chip_defaults():
    """Per-TPU-generation (block_bytes, vmem_limit_bytes_or_None, num_tensorcores)."""
    try:
        kind = jax.devices()[0].device_kind.lower()
    except Exception:  # pragma: no cover - defensive
        kind = ""
    if "v7" in kind:
        # v7x: 64 MiB physical VMEM / 32 MiB scoped, 2 TensorCores per chip.
        # Keep the per-core footprint (4 x 4 MiB = 16 MiB) well under 32 MiB.
        return 4 << 20, 32 << 20, 2
    if "v6" in kind:
        # v6e: 128 MiB physical / 32 MiB default scoped -> 4 MiB blocks fit with headroom.
        return 4 << 20, 32 << 20, 1
    if "v5 lite" in kind or "v5lite" in kind or "v5e" in kind:
        # v5e: default scoped VMEM is only 16 MiB; use 3 MiB blocks (12 MiB footprint)
        # and raise the scoped limit (physical VMEM is 128 MiB, so 32 MiB is safe).
        return 3 << 20, 32 << 20, 1
    if "v5" in kind or "v4" in kind:
        # v5p / v4: 128 MiB physical VMEM.
        return 4 << 20, 32 << 20, 1
    # Unknown chip: stay conservative and do not touch the scoped-VMEM limit.
    return 2 << 20, None, 1


def _impute_aligned(x_flat, total, val, block_bytes, vmem_limit, num_cores, donate):
    """Run the Pallas kernel on a flat float array whose length is a multiple of 128."""
    dtype = x_flat.dtype
    itemsize = jnp.dtype(dtype).itemsize

    # Lane-dense column width that divides the element count (no pad copy ever:
    # 128 always divides `total` here).
    cols = next(c for c in (1024, 512, 256, 128) if total % c == 0)
    rows = total // cols
    sub = _sublane_unit(dtype)

    # Block sized against the per-generation VMEM budget, aligned to the native
    # sublane tile; a small slab is taken as one full-extent block.
    target_rows = max(sub, block_bytes // (cols * itemsize))
    block_rows = rows if rows <= target_rows else (target_rows // sub) * sub
    num_blocks = pl.cdiv(rows, block_rows)

    x2d = x_flat.reshape(rows, cols)

    kernel = functools.partial(_const_impute_kernel, val=float(val))
    cost = pl.CostEstimate(
        flops=total, transcendentals=0, bytes_accessed=2 * total * itemsize
    )
    cp_kwargs = {}
    if vmem_limit is not None:
        cp_kwargs["vmem_limit_bytes"] = int(vmem_limit)

    if num_cores > 1 and num_blocks % num_cores == 0:
        # v7x: split row-blocks across the chip's TensorCores explicitly.
        per_core = num_blocks // num_cores
        grid = (num_cores, per_core)
        index_map = lambda c, i: (c * per_core + i, 0)
        dims = (pltpu.CORE_PARALLEL, pltpu.ARBITRARY)
    else:
        grid = (num_blocks,)
        index_map = lambda i: (i, 0)
        dims = ("parallel",)

    out2d = pl.pallas_call(
        kernel,
        out_shape=jax.ShapeDtypeStruct((rows, cols), dtype),
        grid_spec=pltpu.PrefetchScalarGridSpec(
            num_scalar_prefetch=0,
            grid=grid,
            in_specs=[pl.BlockSpec((block_rows, cols), index_map)],
            out_specs=pl.BlockSpec((block_rows, cols), index_map),
        ),
        compiler_params=pltpu.CompilerParams(dimension_semantics=dims, **cp_kwargs),
        cost_estimate=cost,
        input_output_aliases=({0: 0} if donate else {}),
    )(x2d)
    return out2d.reshape(-1)


def gnet_const_forward(
    x_m: jax.Array,
    val: float,
    *,
    small_fast_path_bytes: int = _SMALL_FAST_PATH_BYTES,
    block_bytes: int | None = None,
    donate_input: bool = False,
) -> jax.Array:
    """Pallas equivalent of GNet_Const.forward. x_m: float array (e.g. NCHW)."""
    dtype = x_m.dtype

    # isnan is only meaningful on floats; torch.isnan gives an all-false mask for
    # non-float dtypes, so the input passes through unchanged.
    if not jnp.issubdtype(dtype, jnp.floating):
        return x_m

    total = x_m.size
    if total == 0:
        return x_m

    itemsize = jnp.dtype(dtype).itemsize
    fill = jnp.asarray(val, dtype)

    # Small-input fast path: pallas_call launch/DMA setup dominates tiny tensors
    # and a plain where() fuses into surrounding producers/consumers.
    if total * itemsize <= small_fast_path_bytes:
        return jnp.where(jnp.isnan(x_m), fill, x_m)

    chip_block, vmem_limit, num_cores = _chip_defaults()
    if block_bytes is None:
        block_bytes = chip_block

    x_flat = x_m.reshape(-1)
    aligned = (total // _LANE) * _LANE

    if aligned == 0:
        # < 128 elements (only reachable when the fast path is disabled).
        return jnp.where(jnp.isnan(x_m), fill, x_m)

    if aligned == total:
        out_flat = _impute_aligned(
            x_flat, total, val, block_bytes, vmem_limit, num_cores, donate_input
        )
    else:
        # Ragged tail (< 128 elements): kernel on the 128-aligned prefix, plain
        # where() on the tail. No full-array pad / slice round trips.
        out_prefix = _impute_aligned(
            x_flat[:aligned], aligned, val, block_bytes, vmem_limit, num_cores, False
        )
        tail = x_flat[aligned:]
        out_tail = jnp.where(jnp.isnan(tail), fill, tail)
        out_flat = jnp.concatenate([out_prefix, out_tail])

    return out_flat.reshape(x_m.shape)


def gnet_const_reference(x_m: jax.Array, val: float) -> jax.Array:
    """Pure-JAX reference matching the PyTorch forward semantics."""
    mask = 1.0 - jnp.isnan(x_m).astype(jnp.float32)
    return jnp.where(mask.astype(bool), x_m, jnp.asarray(val, x_m.dtype))


if __name__ == "__main__":
    key = jax.random.PRNGKey(0)
    k1, k2, k3, k4, k5, k6 = jax.random.split(key, 6)

    VAL = 0.5  # the constant `val` from GNet_Const.__init__

    def check(x_m, **kw):
        out = jax.block_until_ready(gnet_const_forward(x_m, VAL, **kw))
        ref = gnet_const_reference(x_m, VAL)
        assert out.shape == x_m.shape and out.dtype == x_m.dtype
        assert not bool(jnp.any(jnp.isnan(out)))
        assert bool(jnp.array_equal(out, ref))

    # 1) Primary NCHW float32 test: default path (small-input fast path) and the
    #    forced Pallas path (single full-extent block).
    N, C, H, W = 2, 4, 16, 16
    x = jax.random.normal(k1, (N, C, H, W), dtype=jnp.float32)
    x_m = jnp.where(jax.random.uniform(k2, (N, C, H, W)) < 0.3, jnp.nan, x)
    check(x_m)
    check(x_m, small_fast_path_bytes=0)

    # 2) Forced multi-block Pallas grid on a modest lane-divisible slab
    #    (small block_bytes override so the grid loop is actually exercised).
    shape3 = (2, 4, 64, 64)
    x3 = jax.random.normal(k3, shape3, dtype=jnp.float32)
    x3_m = jnp.where(jax.random.uniform(k4, shape3) < 0.2, jnp.nan, x3)
    check(x3_m, small_fast_path_bytes=0, block_bytes=32 * 1024)

    # 3) Awkward ragged bf16 shape: default (fast path) and forced Pallas
    #    prefix + where-tail path (no pad/slice copies).
    shape2 = (3, 5, 17, 11)
    x2 = jax.random.normal(k5, shape2, dtype=jnp.float32).astype(jnp.bfloat16)
    x2_m = jnp.where(
        jax.random.uniform(k6, shape2) < 0.25, jnp.asarray(jnp.nan, jnp.bfloat16), x2
    )
    check(x2_m)
    check(x2_m, small_fast_path_bytes=0)

    print("KERNEL_OK")
</pallas_src>

<mosaic_0001>
module attributes {stable_mosaic.version = 11 : i64} {
  func.func @_const_impute_kernel(%arg0: i32, %arg1: memref<2x1024xf32, #tpu.memory_space<vmem>>, %arg2: memref<2x1024xf32, #tpu.memory_space<vmem>>) attributes {dimension_semantics = [#tpu.dimension_semantics<parallel>], iteration_bounds = array<i64: 1>, scalar_prefetch = 0 : i64, scratch_operands = 0 : i64, tpu.core_type = #tpu.core_type<tc>, window_params = [{transform_indices = @transform_0, window_bounds = array<i64: 2, 1024>}, {transform_indices = @transform_1, window_bounds = array<i64: 2, 1024>}]} {
    %c0 = arith.constant 0 : index
    %c0_0 = arith.constant 0 : index
    %0 = vector.load %arg1[%c0, %c0_0] : memref<2x1024xf32, #tpu.memory_space<vmem>>, vector<2x1024xf32>
    %1 = arith.cmpf one, %0, %0 : vector<2x1024xf32>
    %cst = arith.constant 5.000000e-01 : f32
    %2 = vector.broadcast %cst : f32 to vector<2x1024xf32>
    %3 = arith.select %1, %2, %0 : vector<2x1024xi1>, vector<2x1024xf32>
    %c0_1 = arith.constant 0 : index
    %c0_2 = arith.constant 0 : index
    %4 = vector.load %arg2[%c0_1, %c0_2] : memref<2x1024xf32, #tpu.memory_space<vmem>>, vector<2x1024xf32>
    tpu.vector_store %arg2[%c0_1, %c0_2], %3 {strides = array<i32>} : memref<2x1024xf32, #tpu.memory_space<vmem>>, vector<2x1024xf32>,
    return
  }
  func.func @transform_0(%arg0: i32) -> (i32, i32) {
    %c0_i32 = arith.constant 0 : i32
    %c0_i32_0 = arith.constant 0 : i32
    return %arg0, %c0_i32 : i32, i32
  }
  func.func @transform_1(%arg0: i32) -> (i32, i32) {
    %c0_i32 = arith.constant 0 : i32
    %c0_i32_0 = arith.constant 0 : i32
    return %arg0, %c0_i32 : i32, i32
  }
}

</mosaic_0001>

<llo_original>
// kernel: tpu_custom_call.1
$region0: #{tpu_custom_call.1}
  #allocation0 [shape = 'u32[]', space=smem, size = 0x4, offset = 0x4, fixed_abs, tag = 'smem constant byte address 0x4 - core index']
  #allocation1 [shape = 'u32[144,128]{1,0:T(1,128)}', space=vmem, size = 0x12000, scoped, tag = 'internal scratch']
  %s0 = inlined_call_operand.hbm [shape: f32[2,1024], index: 0, kind: input, shape index: {}]
  %s1 = inlined_call_operand.hbm [shape: f32[2,1024], index: 1, kind: output, shape index: {}]
  %s2 = sld [smem:[#allocation0]]
  $region18: #{tpu_custom_call.1} parent=0
    _
  %s4 = ssub.s32 1, %s2
  %s5 = scalar_select 0, %s4, %s2
  $region1: #{tpu_custom_call.1} parent=0
    #allocation2 [shape = 'u8[8192]{0}', space=vmem, size = 0x2000, scoped, tag = 'input window, operand 0, single buffered']
    #allocation3 [shape = 's32[1]{0}', space=sflag, size = 0x4, scoped, tag = 'scoped memory for tpu_custom_call.1']
    #allocation4 [shape = 's32[1]{0}', space=sflag, size = 0x4, scoped, tag = 'scoped memory for tpu_custom_call.1']
    #allocation5 [shape = 'u8[8192]{0}', space=vmem, size = 0x2000, scoped, tag = 'output window, operand 0, single buffered']
    %6 = vsyncpa [#allocation3], 0
    %7 = vsyncpa [#allocation4], 0
    // Predicated region
    $region2: #{tpu_custom_call.1} parent=1 // pred_check
      _
    $region3: #{tpu_custom_call.1} parent=1 // pred_check_branch
      %9 = sbr.rel (0) target = $region5
    $region4: #{tpu_custom_call.1} parent=1 // pred_region
      %s11 = ssub.s32 256, 256
      %12 = vsyncadd [#allocation3], %s11
      %s14 = sshll.u32 [#allocation2], 4
      %s15 = int_to_ptr.vmem [resolvable:$true] %s14
      %17 = dma.hbm_to_vmem [thread:$0]  %s0, 256, %s15, [#allocation3]
    $region5: #{tpu_custom_call.1} parent=1 // pred_fallthru
      _
    // Predicated region
    $region6: #{tpu_custom_call.1} parent=1 // pred_check
      _
    $region7: #{tpu_custom_call.1} parent=1 // pred_check_branch
      %19 = sbr.rel (0) target = $region9
    $region8: #{tpu_custom_call.1} parent=1 // pred_region
      %20 = dma.done [#allocation3], 256
    $region9: #{tpu_custom_call.1} parent=1 // pred_fallthru
      _
    %v21 = vld [vmem:[#allocation2] sm:$0xff]
    %v22 = vld [vmem:[#allocation2 + $0x8] sm:$0xff]
    %vm23 = vcmp.ne.f32.partialorder %v21, %v21
    %vm24 = vcmp.ne.f32.partialorder %v22, %v22
    %v25 = vsel %vm23, 0.5, %v21
    %v26 = vsel %vm24, 0.5, %v22
    %27 = vst [vmem:[#allocation5] sm:$0xff] %v25
    %28 = vst [vmem:[#allocation5 + $0x8] sm:$0xff] %v26
    // Predicated region
    $region10: #{tpu_custom_call.1} parent=1 // pred_check
      _
    $region11: #{tpu_custom_call.1} parent=1 // pred_check_branch
      %30 = sbr.rel (0) target = $region13
    $region12: #{tpu_custom_call.1} parent=1 // pred_region
      %s32 = ssub.s32 256, 256
      %33 = vsyncadd [#allocation4], %s32
      %s35 = sshll.u32 [#allocation5], 4
      %s36 = int_to_ptr.vmem [resolvable:$true] %s35
      %38 = dma.vmem_to_hbm [thread:$0]  %s36, 256, %s1, [#allocation4]
    $region13: #{tpu_custom_call.1} parent=1 // pred_fallthru
      _
    // Predicated region
    $region14: #{tpu_custom_call.1} parent=1 // pred_check
      _
    $region15: #{tpu_custom_call.1} parent=1 // pred_check_branch
      %40 = sbr.rel (0) target = $region17
    $region16: #{tpu_custom_call.1} parent=1 // pred_region
      %41 = dma.done [#allocation4], 256
    $region17: #{tpu_custom_call.1} parent=1 // pred_fallthru
      _
    %42 = vsyncpa [#allocation3], 1
    %43 = vsyncpa [#allocation4], 1

</llo_original>
